<compile_context>
chip_gen: v6e
topology: v6e:2x2x1
jax: 0.10.0
libtpu: 0.0.40
codegen_flags: <defaults>
</compile_context>

<pallas_src>
import functools

import jax
import jax.numpy as jnp
from jax.experimental import pallas as pl
from jax.experimental.pallas import tpu as pltpu


def _round_up(x, m):
    return ((x + m - 1) // m) * m


def _tpu_vmem_and_cores():
    """Best-effort (VMEM capacity bytes, TensorCores per chip); safe fallbacks."""
    vmem_cap = 128 * 1024 * 1024
    cores = 1
    try:
        info = pltpu.get_tpu_info()
        cap = int(getattr(info, "vmem_capacity_bytes", 0) or 0)
        if cap > 0:
            vmem_cap = cap
        for name in ("num_cores", "core_count", "num_tensorcores"):
            v = getattr(info, name, None)
            if v is not None and int(v) > 0:
                cores = int(v)
                break
    except Exception:
        pass
    if cores == 1:
        try:
            v = getattr(jax.devices()[0], "num_cores", None)
            if v is not None and int(v) > 0:
                cores = int(v)
        except Exception:
            pass
    return vmem_cap, cores


def _row_valid(blk, tile_n, n_rows):
    """(tile_n, 1) bool mask: True for rows whose global index is < n_rows."""
    bound = n_rows - blk * tile_n                     # traced scalar
    row = jax.lax.broadcasted_iota(jnp.int32, (tile_n, 1), 0)
    return row < bound


def _per_row_focal(logits, tgt_col, weight_col, valid_col, gamma):
    """Per-row focal loss for one (tile_n, C) tile. Returns (tile_n, 1) f32."""
    x = logits.astype(jnp.float32)                                 # (TN, C)
    C = x.shape[1]

    # Numerically stable log-softmax pieces; exp(x - m) is reused for the
    # denominator so no second full-tile exp / exp(-ce) is needed.
    m = jnp.max(x, axis=1, keepdims=True)                          # (TN, 1)
    xs = x - m
    e = jnp.exp(xs)                                                # (TN, C) EUP
    sumexp = jnp.sum(e, axis=1, keepdims=True)                     # (TN, 1)

    # target_logit - m via a select (no one-hot int->f32 convert + multiply);
    # the (1, C) iota broadcasts against the (TN, 1) targets in the compare.
    cls = jax.lax.broadcasted_iota(jnp.int32, (1, C), 1)
    onehot = cls == tgt_col.astype(jnp.int32)                      # (TN, C) bool
    tlm = jnp.sum(jnp.where(onehot, xs, 0.0), axis=1, keepdims=True)

    # ce >= 0 mathematically; the clamp keeps the non-integer-gamma pow path
    # away from tiny negative bases (NaN hazard).
    ce = jnp.maximum(jnp.log(sumexp) - tlm, 0.0)                   # (TN, 1)
    pt = jnp.exp(-ce)
    omp = 1.0 - pt

    gi = int(gamma)
    if float(gamma) == float(gi) and 0 <= gi <= 8:
        # Integer gamma (the default 2.0): plain VPU multiplies, no EUP pow.
        mod = jnp.ones_like(omp) if gi == 0 else omp
        for _ in range(gi - 1):
            mod = mod * omp
    else:
        mod = omp ** gamma

    focal = weight_col * mod * ce
    # Select (not multiply): rows past N in a partial tile may hold stale
    # VMEM garbage (possibly NaN/Inf) and must be forced to exactly 0.
    return jnp.where(valid_col, focal, 0.0)


def _focal_reduce_kernel(logits_ref, aux_ref, out_ref, acc_ref, *,
                         gamma, n_rows, tile_n, s_per_core):
    s = pl.program_id(1)

    @pl.when(s == 0)
    def _():
        acc_ref[...] = jnp.zeros_like(acc_ref)

    blk = pl.program_id(0) * s_per_core + s           # logical (unclamped) block
    valid = _row_valid(blk, tile_n, n_rows)
    focal = _per_row_focal(logits_ref[...], aux_ref[:, 0:1], aux_ref[:, 1:2],
                           valid, gamma)
    # Element-wise vector accumulation; the single cross-lane reduce happens
    # once under the final pl.when.
    acc_ref[...] += focal

    @pl.when(s == pl.num_programs(1) - 1)
    def _():
        out_ref[...] = jnp.broadcast_to(jnp.sum(acc_ref[...]), out_ref.shape)


def _focal_none_kernel(logits_ref, aux_ref, out_ref, *, gamma, n_rows, tile_n):
    blk = pl.program_id(0)
    valid = _row_valid(blk, tile_n, n_rows)
    out_ref[...] = _per_row_focal(logits_ref[...], aux_ref[:, 0:1],
                                  aux_ref[:, 1:2], valid, gamma)


def focal_loss(logits, targets, *, alpha=None, gamma=2.0, reduction="mean",
               max_tile_n=8192):
    """Pallas TPU implementation of FocalLoss.forward.

    logits:  (N, C) float (any float dtype; widened to f32 per tile in VMEM)
    targets: (N,)   int class indices
    alpha:   None, float/int, list, or array of length C
    reduction: 'mean' | 'sum' | anything else -> per-sample (N,) losses
    """
    N, C = logits.shape
    itemsize = jnp.dtype(logits.dtype).itemsize
    targets = targets.astype(jnp.int32)

    # alpha gathered per-sample in the wrapper (tiny (N,) gather) instead of a
    # per-tile (tile_n, C) broadcast-multiply + extra cross-lane reduce.
    if alpha is None:
        alpha_t = jnp.ones((N,), jnp.float32)
    elif isinstance(alpha, (float, int)):
        alpha_t = jnp.full((N,), float(alpha), jnp.float32)
    else:
        alpha_vec = jnp.asarray(alpha, jnp.float32).reshape(-1)
        if alpha_vec.shape[0] != C:
            raise ValueError(f"alpha size {alpha_vec.shape[0]} != C {C}")
        alpha_t = alpha_vec[targets]

    # targets + per-sample weight packed into ONE (N, 2) f32 side stream so a
    # single lane-padded (tile_n, 128) VMEM buffer pair covers both.
    aux = jnp.stack([targets.astype(jnp.float32), alpha_t], axis=1)

    # ---- generation-aware tile sizing --------------------------------------
    vmem_cap, n_cores = _tpu_vmem_and_cores()
    budget = (20 if vmem_cap <= 64 * 1024 * 1024 else 28) * 1024 * 1024
    # logits double buffer + ~3 f32 full-tile temporaries + lane-padded aux
    # double buffer + lane-padded (tile_n, 1) accumulator / output column.
    bytes_per_row = 2 * C * itemsize + 3 * C * 4 + 2 * 128 * 4 + 2 * 128 * 4
    tile_n = budget // bytes_per_row
    tile_n = int(min(tile_n, max_tile_n, _round_up(N, 8)))
    tile_n = max(8, (tile_n // 8) * 8)
    num_tiles = -(-N // tile_n)

    reduce_mode = reduction in ("mean", "sum")
    # Megacore split only when the hardware actually reports >1 TensorCore.
    # TODO(synk): verify with a trace that "parallel" shards across v7x's two
    # TCs; if not, switch the leading axis to pltpu.CORE_PARALLEL.
    P = 1
    if reduce_mode and n_cores > 1 and num_tiles >= 2:
        P = min(n_cores, num_tiles)
    S = -(-num_tiles // P)

    cost = pl.CostEstimate(
        flops=int(10 * N * C),
        transcendentals=int(N * (C + 2)),
        bytes_accessed=int(N * C * itemsize + N * 8 +
                           (4 if reduce_mode else N * 4)),
    )
    cparams = pltpu.CompilerParams(
        dimension_semantics=("parallel", "arbitrary") if reduce_mode
        else ("parallel",),
        vmem_limit_bytes=int(budget + 12 * 1024 * 1024),
    )

    if reduce_mode:
        if P * S == num_tiles:
            def blk_of(p, s):
                return p * S + s
        else:
            # Overflow blocks (tile count not divisible by core count) re-read
            # the last real block; the in-kernel row mask zeroes them out.
            def blk_of(p, s):
                return jnp.minimum(p * S + s, num_tiles - 1)

        kernel = functools.partial(_focal_reduce_kernel, gamma=float(gamma),
                                   n_rows=N, tile_n=tile_n, s_per_core=S)
        out = pl.pallas_call(
            kernel,
            out_shape=jax.ShapeDtypeStruct((P, 8, 128), jnp.float32),
            grid_spec=pltpu.PrefetchScalarGridSpec(
                num_scalar_prefetch=0,
                grid=(P, S),
                in_specs=[
                    pl.BlockSpec((tile_n, C), lambda p, s: (blk_of(p, s), 0)),
                    pl.BlockSpec((tile_n, 2), lambda p, s: (blk_of(p, s), 0)),
                ],
                out_specs=pl.BlockSpec((1, 8, 128), lambda p, s: (p, 0, 0)),
                scratch_shapes=[pltpu.VMEM((tile_n, 1), jnp.float32)],
            ),
            compiler_params=cparams,
            cost_estimate=cost,
        )(logits, aux)
        total = jnp.sum(out[:, 0, 0])          # sum per-core partials
        if reduction == "mean":
            return total / jnp.float32(N)
        return total

    # reduction == 'none' (per-sample losses)
    kernel = functools.partial(_focal_none_kernel, gamma=float(gamma),
                               n_rows=N, tile_n=tile_n)
    out = pl.pallas_call(
        kernel,
        out_shape=jax.ShapeDtypeStruct((N, 1), jnp.float32),
        grid_spec=pltpu.PrefetchScalarGridSpec(
            num_scalar_prefetch=0,
            grid=(num_tiles,),
            in_specs=[
                pl.BlockSpec((tile_n, C), lambda i: (i, 0)),
                pl.BlockSpec((tile_n, 2), lambda i: (i, 0)),
            ],
            out_specs=pl.BlockSpec((tile_n, 1), lambda i: (i, 0)),
        ),
        compiler_params=cparams,
        cost_estimate=cost,
    )(logits, aux)
    return out[:, 0]


def _reference_focal_loss(logits, targets, alpha_vec, gamma, reduction):
    logp = jax.nn.log_softmax(logits.astype(jnp.float32), axis=-1)
    ce = -jnp.take_along_axis(logp, targets[:, None], axis=1)[:, 0]
    pt = jnp.exp(-ce)
    fl = (1.0 - pt) ** gamma * ce
    if alpha_vec is not None:
        fl = alpha_vec[targets] * fl
    if reduction == "mean":
        return fl.mean()
    if reduction == "sum":
        return fl.sum()
    return fl


if __name__ == "__main__":
    key = jax.random.PRNGKey(0)
    k1, k2 = jax.random.split(key)

    # Small but lane-friendly shapes: C = 128 fills the vector lanes; N = 200
    # exercises the partial (masked) last tile.  max_tile_n=64 forces a
    # multi-tile grid; the default settings run everything in a single tile.
    N, C = 200, 128
    logits = jax.random.normal(k1, (N, C), jnp.float32)
    targets = jax.random.randint(k2, (N,), 0, C, jnp.int32)
    alpha = [0.25 + 0.005 * i for i in range(C)]
    gamma = 2.0

    out_mean = focal_loss(logits, targets, alpha=alpha, gamma=gamma,
                          reduction="mean", max_tile_n=64)
    out_sum = focal_loss(logits, targets, alpha=alpha, gamma=gamma,
                         reduction="sum")
    out_none = focal_loss(logits, targets, alpha=alpha, gamma=gamma,
                          reduction="none", max_tile_n=64)
    out_mean_noalpha = focal_loss(logits, targets, alpha=None, gamma=gamma,
                                  reduction="mean")
    jax.block_until_ready((out_mean, out_sum, out_none, out_mean_noalpha))

    alpha_arr = jnp.asarray(alpha, jnp.float32)
    ref = _reference_focal_loss(logits, targets, alpha_arr, gamma, "none")
    ref_noalpha = _reference_focal_loss(logits, targets, None, gamma, "none")
    assert jnp.allclose(out_mean, ref.mean(), rtol=1e-4, atol=1e-6), (
        out_mean, ref.mean())
    assert jnp.allclose(out_sum, ref.sum(), rtol=1e-4, atol=1e-4), (
        out_sum, ref.sum())
    assert jnp.allclose(out_none, ref, rtol=1e-4, atol=1e-5)
    assert jnp.allclose(out_mean_noalpha, ref_noalpha.mean(),
                        rtol=1e-4, atol=1e-6), (out_mean_noalpha,
                                                ref_noalpha.mean())

    print("KERNEL_OK")
</pallas_src>

<mosaic_0001>
module attributes {stable_mosaic.version = 11 : i64} {
  func.func @_focal_reduce_kernel(%arg0: i32, %arg1: i32, %arg2: memref<64x128xf32, #tpu.memory_space<vmem>>, %arg3: memref<64x2xf32, #tpu.memory_space<vmem>>, %arg4: memref<1x8x128xf32, #tpu.memory_space<vmem>>, %arg5: memref<64x1xf32, #tpu.memory_space<vmem>>) attributes {dimension_semantics = [#tpu.dimension_semantics<parallel>, #tpu.dimension_semantics<arbitrary>], iteration_bounds = array<i64: 1, 4>, scalar_prefetch = 0 : i64, scratch_operands = 1 : i64, tpu.core_type = #tpu.core_type<tc>, window_params = [{transform_indices = @transform_0, window_bounds = array<i64: 64, 128>}, {transform_indices = @transform_1, window_bounds = array<i64: 64, 2>}, {transform_indices = @transform_2, window_bounds = array<i64: 1, 8, 128>}]} {
    %c0_i32 = arith.constant 0 : i32
    %0 = arith.cmpi eq, %arg1, %c0_i32 : i32
    %1 = arith.extui %0 : i1 to i32
    %c0_i32_0 = arith.constant 0 : i32
    %2 = arith.cmpi ne, %1, %c0_i32_0 : i32
    scf.if %2 {
      %cst_17 = arith.constant 0.000000e+00 : f32
      %49 = vector.broadcast %cst_17 : f32 to vector<64x1xf32>
      %c0_18 = arith.constant 0 : index
      %c0_19 = arith.constant 0 : index
      %50 = vector.load %arg5[%c0_18, %c0_19] : memref<64x1xf32, #tpu.memory_space<vmem>>, vector<64x1xf32>
      tpu.vector_store %arg5[%c0_18, %c0_19], %49 {strides = array<i32>} : memref<64x1xf32, #tpu.memory_space<vmem>>, vector<64x1xf32>,
    } else {
    }
    %c4_i32 = arith.constant 4 : i32
    %3 = arith.muli %arg0, %c4_i32 : i32
    %4 = arith.addi %3, %arg1 : i32
    %c64_i32 = arith.constant 64 : i32
    %5 = arith.muli %4, %c64_i32 : i32
    %c200_i32 = arith.constant 200 : i32
    %6 = arith.subi %c200_i32, %5 : i32
    %7 = tpu.iota {dimensions = array<i32: 0>} : vector<64x1xi32>
    %8 = vector.broadcast %6 : i32 to vector<64x1xi32>
    %9 = arith.cmpi slt, %7, %8 : vector<64x1xi32>
    %c0 = arith.constant 0 : index
    %c0_1 = arith.constant 0 : index
    %10 = vector.load %arg2[%c0, %c0_1] : memref<64x128xf32, #tpu.memory_space<vmem>>, vector<64x128xf32>
    %c0_2 = arith.constant 0 : index
    %c0_3 = arith.constant 0 : index
    %11 = vector.load %arg3[%c0_2, %c0_3] : memref<64x2xf32, #tpu.memory_space<vmem>>, vector<64x1xf32>
    %c0_4 = arith.constant 0 : index
    %c1 = arith.constant 1 : index
    %12 = vector.load %arg3[%c0_4, %c1] : memref<64x2xf32, #tpu.memory_space<vmem>>, vector<64x1xf32>
    %cst = arith.constant dense<0xFF800000> : vector<64xf32>
    %13 = vector.multi_reduction <maximumf>, %10, %cst [1] : vector<64x128xf32> to vector<64xf32>
    %14 = vector.shape_cast %13 : vector<64xf32> to vector<64x1xf32>
    %15 = vector.broadcast %14 : vector<64x1xf32> to vector<64x128xf32>
    %16 = arith.subf %10, %15 : vector<64x128xf32>
    %17 = math.exp %16 : vector<64x128xf32>
    %cst_5 = arith.constant dense<0.000000e+00> : vector<64xf32>
    %18 = vector.multi_reduction <add>, %17, %cst_5 [1] : vector<64x128xf32> to vector<64xf32>
    %19 = vector.shape_cast %18 : vector<64xf32> to vector<64x1xf32>
    %20 = tpu.iota {dimensions = array<i32: 1>} : vector<1x128xi32>
    %21 = arith.fptosi %11 : vector<64x1xf32> to vector<64x1xi32>
    %22 = vector.broadcast %20 : vector<1x128xi32> to vector<64x128xi32>
    %23 = vector.broadcast %21 : vector<64x1xi32> to vector<64x128xi32>
    %24 = arith.cmpi eq, %22, %23 : vector<64x128xi32>
    %cst_6 = arith.constant 0.000000e+00 : f32
    %25 = vector.broadcast %cst_6 : f32 to vector<64x128xf32>
    %26 = arith.select %24, %16, %25 : vector<64x128xi1>, vector<64x128xf32>
    %cst_7 = arith.constant dense<0.000000e+00> : vector<64xf32>
    %27 = vector.multi_reduction <add>, %26, %cst_7 [1] : vector<64x128xf32> to vector<64xf32>
    %28 = vector.shape_cast %27 : vector<64xf32> to vector<64x1xf32>
    %29 = math.log %19 : vector<64x1xf32>
    %30 = arith.subf %29, %28 : vector<64x1xf32>
    %cst_8 = arith.constant 0.000000e+00 : f32
    %31 = vector.broadcast %cst_8 : f32 to vector<64x1xf32>
    %32 = arith.maximumf %30, %31 : vector<64x1xf32>
    %cst_9 = arith.constant 0.000000e+00 : f32
    %33 = vector.broadcast %cst_9 : f32 to vector<64x1xf32>
    %34 = arith.subf %33, %32 : vector<64x1xf32>
    %35 = math.exp %34 : vector<64x1xf32>
    %cst_10 = arith.constant 1.000000e+00 : f32
    %36 = vector.broadcast %cst_10 : f32 to vector<64x1xf32>
    %37 = arith.subf %36, %35 : vector<64x1xf32>
    %38 = arith.mulf %37, %37 : vector<64x1xf32>
    %39 = arith.mulf %12, %38 : vector<64x1xf32>
    %40 = arith.mulf %39, %32 : vector<64x1xf32>
    %cst_11 = arith.constant 0.000000e+00 : f32
    %41 = vector.broadcast %cst_11 : f32 to vector<64x1xf32>
    %42 = arith.select %9, %40, %41 : vector<64x1xi1>, vector<64x1xf32>
    %c0_12 = arith.constant 0 : index
    %c0_13 = arith.constant 0 : index
    %43 = vector.load %arg5[%c0_12, %c0_13] : memref<64x1xf32, #tpu.memory_space<vmem>>, vector<64x1xf32>
    %44 = arith.addf %43, %42 : vector<64x1xf32>
    %c0_14 = arith.constant 0 : index
    %c0_15 = arith.constant 0 : index
    %45 = vector.load %arg5[%c0_14, %c0_15] : memref<64x1xf32, #tpu.memory_space<vmem>>, vector<64x1xf32>
    tpu.vector_store %arg5[%c0_14, %c0_15], %44 {strides = array<i32>} : memref<64x1xf32, #tpu.memory_space<vmem>>, vector<64x1xf32>,
    %c3_i32 = arith.constant 3 : i32
    %46 = arith.cmpi eq, %arg1, %c3_i32 : i32
    %47 = arith.extui %46 : i1 to i32
    %c0_i32_16 = arith.constant 0 : i32
    %48 = arith.cmpi ne, %47, %c0_i32_16 : i32
    scf.if %48 {
      %c0_17 = arith.constant 0 : index
      %c0_18 = arith.constant 0 : index
      %49 = vector.load %arg5[%c0_17, %c0_18] : memref<64x1xf32, #tpu.memory_space<vmem>>, vector<64x1xf32>
      %50 = vector.shape_cast %49 : vector<64x1xf32> to vector<1x64x1xf32>
      %cst_19 = arith.constant dense<0.000000e+00> : vector<1xf32>
      %51 = vector.multi_reduction <add>, %50, %cst_19 [1, 2] : vector<1x64x1xf32> to vector<1xf32>
      %52 = vector.shape_cast %51 : vector<1xf32> to vector<1x1x1xf32>
      %53 = vector.extract %52[0, 0, 0] : f32 from vector<1x1x1xf32>
      %54 = vector.broadcast %53 : f32 to vector<1x8x128xf32>
      %c0_20 = arith.constant 0 : index
      %c0_21 = arith.constant 0 : index
      %c0_22 = arith.constant 0 : index
      %55 = vector.load %arg4[%c0_20, %c0_21, %c0_22] : memref<1x8x128xf32, #tpu.memory_space<vmem>>, vector<1x8x128xf32>
      tpu.vector_store %arg4[%c0_20, %c0_21, %c0_22], %54 {strides = array<i32>} : memref<1x8x128xf32, #tpu.memory_space<vmem>>, vector<1x8x128xf32>,
    } else {
    }
    return
  }
  func.func @transform_0(%arg0: i32, %arg1: i32) -> (i32, i32) {
    %c4_i32 = arith.constant 4 : i32
    %0 = arith.muli %arg0, %c4_i32 : i32
    %1 = arith.addi %0, %arg1 : i32
    %c0_i32 = arith.constant 0 : i32
    %c0_i32_0 = arith.constant 0 : i32
    return %1, %c0_i32 : i32, i32
  }
  func.func @transform_1(%arg0: i32, %arg1: i32) -> (i32, i32) {
    %c4_i32 = arith.constant 4 : i32
    %0 = arith.muli %arg0, %c4_i32 : i32
    %1 = arith.addi %0, %arg1 : i32
    %c0_i32 = arith.constant 0 : i32
    %c0_i32_0 = arith.constant 0 : i32
    return %1, %c0_i32 : i32, i32
  }
  func.func @transform_2(%arg0: i32, %arg1: i32) -> (i32, i32, i32) {
    %c0_i32 = arith.constant 0 : i32
    %c0_i32_0 = arith.constant 0 : i32
    %c0_i32_1 = arith.constant 0 : i32
    return %arg0, %c0_i32, %c0_i32_0 : i32, i32, i32
  }
}

</mosaic_0001>

<llo_original>
// kernel: tpu_custom_call.1
$region0: #{tpu_custom_call.1}
  #allocation0 [shape = 'u32[]', space=smem, size = 0x4, offset = 0x4, fixed_abs, tag = 'smem constant byte address 0x4 - core index']
  #allocation1 [shape = 'u32[144,128]{1,0:T(1,128)}', space=vmem, size = 0x12000, scoped, tag = 'internal scratch']
  #allocation2 [shape = 'f32[64,1]{1,0:T(8,128)}', space=vmem, size = 0x8000, scoped, tag = 'scratch operand']
  %s0 = inlined_call_operand.vmem [shape: f32[200,128], index: 0, kind: input, shape index: {}]
  %s1 = inlined_call_operand.vmem [shape: f32[200,2], index: 1, kind: input, shape index: {}]
  %s2 = inlined_call_operand.hbm [shape: f32[1,8,128], index: 2, kind: output, shape index: {}]
  %s3 = sld [smem:[#allocation0]]
  $region49: #{tpu_custom_call.1} parent=0
    _
  %s5 = ssub.s32 1, %s3
  %s6 = scalar_select 0, %s5, %s3
  $region1: #{tpu_custom_call.1} parent=0
    #allocation3 [shape = 'u8[4096]{0}', space=vmem, size = 0x1000, scoped, tag = 'output window, operand 0, single buffered']
    #allocation4 [shape = 's32[2]{0}', space=sflag, size = 0x8, scoped, tag = 'scoped memory for tpu_custom_call.1']
    %7 = vsyncpa [#allocation4], 0
    loop: start=0, step=1, limit=6
    $region2: #{tpu_custom_call.1} parent=1 // loop_pre_header
      _
    $region3: #{tpu_custom_call.1} parent=1 // loop_header
      %s9 = sphi 0, %s13
      %p10 = scmp.ge.s32.totalorder %s9, 6
      %s16 = sphi 0, %s28
      %s17 = sphi 0, %s24
      %s18 = sphi 0, %s16
      %s19 = sphi 0, %s17
      %s20 = sphi 0, %s18
      %s21 = sphi 0, %s19
      %s35 = sphi 0, %s37
      %s38 = sphi 0, %s35
      %s39 = sphi 0, %s38
      %s55 = sphi 0, %s39
      %s65 = sphi 0, %s67
      %s68 = sphi 0, %s65
      %s69 = sphi 0, %s68
      %s85 = sphi 0, %s69
      %s91 = sphi 0, %s93
      %s94 = sphi 0, %s91
      %s95 = sphi 0, %s94
      %s111 = sphi 0, %s95
    $region4: #{tpu_custom_call.1} parent=1 // loop_header_branch
      %12 = sbr.rel (%p10) target = $region8
    $region5: #{tpu_custom_call.1} parent=1 // loop_body
      %s14 = ssub.s32 %s9, 1
      %s15 = ssub.s32 %s9, 2
      %s22 = sadd.s32 1, %s17
      %p23 = scmp.ge.s32.totalorder %s22, 4
      %s24 = scalar_select %p23, 0, %s22
      %s25 = sadd.s32 1, %s16
      %s26 = scalar_select %p23, %s25, %s16
      %p27 = scmp.ge.s32.totalorder %s26, 1
      %s28 = scalar_select %p27, 0, %s26
      %s29 = smul.u32 %s16, 4
      %s30 = sadd.s32 %s29, %s17
      %s31 = smul.u32 %s28, 4
      %s32 = sadd.s32 %s31, %s24
      %s33 = ssub.s32 %s30, %s32
      %p34 = scmp.eq.s32.totalorder %s33, 0
      %s36 = sadd.s32 %s35, 1
      %s37 = scalar_select %p34, %s35, %s36
      %p40 = pneg %p34
      %p41 = scmp.eq.s32.totalorder %s9, 3
      %p42 = por %p40, %p41
      %p43 = scmp.ne.s32.totalorder %s35, %s38
      %p44 = scmp.eq.s32.totalorder %s9, 0
      %p45 = por %p43, %p44
      %p46 = scmp.ne.s32.totalorder %s35, %s38
      %p47 = scmp.eq.s32.totalorder %s14, 3
      %p48 = por %p46, %p47
      %p49 = scmp.ne.s32.totalorder %s38, %s39
      %p50 = scmp.eq.s32.totalorder %s14, 0
      %p51 = por %p49, %p50
      %p52 = scmp.ne.s32.totalorder %s38, %s39
      %p53 = scmp.eq.s32.totalorder %s15, 3
      %p54 = por %p52, %p53
      %p56 = scmp.ne.s32.totalorder %s39, %s55
      %p57 = scmp.eq.s32.totalorder %s15, 0
      %p58 = por %p56, %p57
      %s59 = smul.u32 %s16, 4
      %s60 = sadd.s32 %s59, %s17
      %s61 = smul.u32 %s28, 4
      %s62 = sadd.s32 %s61, %s24
      %s63 = ssub.s32 %s60, %s62
      %p64 = scmp.eq.s32.totalorder %s63, 0
      %s66 = sadd.s32 %s65, 1
      %s67 = scalar_select %p64, %s65, %s66
      %p70 = pneg %p64
      %p71 = scmp.eq.s32.totalorder %s9, 3
      %p72 = por %p70, %p71
      %p73 = scmp.ne.s32.totalorder %s65, %s68
      %p74 = scmp.eq.s32.totalorder %s9, 0
      %p75 = por %p73, %p74
      %p76 = scmp.ne.s32.totalorder %s65, %s68
      %p77 = scmp.eq.s32.totalorder %s14, 3
      %p78 = por %p76, %p77
      %p79 = scmp.ne.s32.totalorder %s68, %s69
      %p80 = scmp.eq.s32.totalorder %s14, 0
      %p81 = por %p79, %p80
      %p82 = scmp.ne.s32.totalorder %s68, %s69
      %p83 = scmp.eq.s32.totalorder %s15, 3
      %p84 = por %p82, %p83
      %p86 = scmp.ne.s32.totalorder %s69, %s85
      %p87 = scmp.eq.s32.totalorder %s15, 0
      %p88 = por %p86, %p87
      %s89 = ssub.s32 %s16, %s28
      %p90 = scmp.eq.s32.totalorder %s89, 0
      %s92 = sadd.s32 %s91, 1
      %s93 = scalar_select %p90, %s91, %s92
      %p96 = pneg %p90
      %p97 = scmp.eq.s32.totalorder %s9, 3
      %p98 = por %p96, %p97
      %p99 = scmp.ne.s32.totalorder %s91, %s94
      %p100 = scmp.eq.s32.totalorder %s9, 0
      %p101 = por %p99, %p100
      %p102 = scmp.ne.s32.totalorder %s91, %s94
      %p103 = scmp.eq.s32.totalorder %s14, 3
      %p104 = por %p102, %p103
      %p105 = scmp.ne.s32.totalorder %s94, %s95
      %p106 = scmp.eq.s32.totalorder %s14, 0
      %p107 = por %p105, %p106
      %p108 = scmp.ne.s32.totalorder %s94, %s95
      %p109 = scmp.eq.s32.totalorder %s15, 3
      %p110 = por %p108, %p109
      %p112 = scmp.ne.s32.totalorder %s95, %s111
      %p113 = scmp.eq.s32.totalorder %s15, 0
      %p114 = por %p112, %p113
      %p115 = scmp.le.s32.totalorder 1, %s9
      %p116 = scmp.lt.s32.totalorder %s9, 5
      %p117 = pnand %p115, %p116
      %p118 = pneg %p117
      // Predicated region
      $region9: #{tpu_custom_call.1} parent=5 // pred_check
        _
      $region10: #{tpu_custom_call.1} parent=5 // pred_check_branch
        %120 = sbr.rel (%p117) target = $region12
      $region11: #{tpu_custom_call.1} parent=5 // pred_region
        %s121 = ssub.s32 %s9, 1
      $region12: #{tpu_custom_call.1} parent=5 // pred_fallthru
        _
      %p122 = scmp.lt.s32.totalorder %s9, 4
      // Predicated region
      $region13: #{tpu_custom_call.1} parent=5 // pred_check
        %p123 = pneg %p122
      $region14: #{tpu_custom_call.1} parent=5 // pred_check_branch
        %125 = sbr.rel (%p123) target = $region16
      $region15: #{tpu_custom_call.1} parent=5 // pred_region
        // Predicated region
        $region17: #{tpu_custom_call.1} parent=15 // pred_check
          %p126 = pneg %p45
        $region18: #{tpu_custom_call.1} parent=15 // pred_check_branch
          %128 = sbr.rel (%p126) target = $region20
        $region19: #{tpu_custom_call.1} parent=15 // pred_region
          %s129 = smul.u32 %s16, 4
          %s130 = sadd.s32 %s129, %s17
          %s131 = smul.u32 8, %s130
          %s132 = ssub.s32 25, %s131
          %p133 = scmp.lt.s32.totalorder %s132, 8
          %s134 = scalar_select %p133, %s132, 8
          %s135 = smul.u32 128, %s134
          %p136 = scmp.lt.s32.totalorder %s131, 24
          %s137 = scalar_select %p136, %s131, 24
          %s138 = smul.addr %s137, 8
          %s139 = scalar_lea.vmem %s0, %s138
          %s140 = smul.u32 %s16, 4
          %s141 = sadd.s32 %s140, %s17
          %s142 = smul.u32 8, %s141
          %s143 = ssub.s32 25, %s142
          %p144 = scmp.lt.s32.totalorder %s143, 8
          %s145 = scalar_select %p144, %s143, 8
          %s146 = smul.u32 128, %s145
        $region20: #{tpu_custom_call.1} parent=15 // pred_fallthru
          _
        // Predicated region
        $region21: #{tpu_custom_call.1} parent=15 // pred_check
          %p147 = pneg %p75
        $region22: #{tpu_custom_call.1} parent=15 // pred_check_branch
          %149 = sbr.rel (%p147) target = $region24
        $region23: #{tpu_custom_call.1} parent=15 // pred_region
          %s150 = smul.u32 %s16, 4
          %s151 = sadd.s32 %s150, %s17
          %s152 = smul.u32 8, %s151
          %s153 = ssub.s32 25, %s152
          %p154 = scmp.lt.s32.totalorder %s153, 8
          %s155 = scalar_select %p154, %s153, 8
          %s156 = smul.u32 128, %s155
          %p157 = scmp.lt.s32.totalorder %s152, 24
          %s158 = scalar_select %p157, %s152, 24
          %s159 = smul.addr %s158, 8
          %s160 = scalar_lea.vmem %s1, %s159
          %s161 = smul.u32 %s16, 4
          %s162 = sadd.s32 %s161, %s17
          %s163 = smul.u32 8, %s162
          %s164 = ssub.s32 25, %s163
          %p165 = scmp.lt.s32.totalorder %s164, 8
          %s166 = scalar_select %p165, %s164, 8
          %s167 = smul.u32 128, %s166
        $region24: #{tpu_custom_call.1} parent=15 // pred_fallthru
          _
      $region16: #{tpu_custom_call.1} parent=5 // pred_fallthru
        _
      %p168 = scmp.le.s32.totalorder 1, %s9
      %p169 = scmp.lt.s32.totalorder %s9, 5
      %p170 = pnand %p168, %p169
      %p171 = pneg %p170
      // Predicated region
      $region25: #{tpu_custom_call.1} parent=5 // pred_check
        _
      $region26: #{tpu_custom_call.1} parent=5 // pred_check_branch
        %173 = sbr.rel (%p170) target = $region28
      $region27: #{tpu_custom_call.1} parent=5 // pred_region
        %s174 = ssub.s32 %s9, 1
        %s175 = smul.u32 %s18, 4
        %s176 = sadd.s32 %s175, %s19
        %s177 = smul.u32 8, %s176
        %s178 = ssub.s32 25, %s177
        %p179 = scmp.lt.s32.totalorder %s178, 8
        %s180 = scalar_select %p179, %s178, 8
        %s181 = smul.u32 128, %s180
        %p182 = scmp.lt.s32.totalorder %s177, 24
        %s183 = scalar_select %p182, %s177, 24
        %s184 = smul.addr %s183, 8
        %s185 = scalar_lea.vmem %s0, %s184
        %p186 = pneg %p51
        %p187 = pneg %p48
        %s188 = smul.u32 %s18, 4
        %s189 = sadd.s32 %s188, %s19
        %s190 = smul.u32 8, %s189
        %s191 = ssub.s32 25, %s190
        %p192 = scmp.lt.s32.totalorder %s191, 8
        %s193 = scalar_select %p192, %s191, 8
        %s194 = smul.u32 128, %s193
        %p195 = scmp.lt.s32.totalorder %s190, 24
        %s196 = scalar_select %p195, %s190, 24
        %s197 = smul.addr %s196, 8
        %s198 = scalar_lea.vmem %s1, %s197
        %p199 = pneg %p81
        %p200 = pneg %p78
        %p201 = pneg %p107
        %p202 = pneg %p104
        %s203 = smul.u32 %s18, 4
        %s204 = sadd.s32 %s203, %s19
        %s205 = smul.u32 8, %s204
        %s206 = ssub.s32 25, %s205
        %p207 = scmp.lt.s32.totalorder %s206, 8
        %s208 = scalar_select %p207, %s206, 8
        %s209 = smul.u32 128, %s208
        %p210 = scmp.lt.s32.totalorder %s205, 24
        %s211 = scalar_select %p210, %s205, 24
        %s212 = smul.addr %s211, 8
        %s213 = scalar_lea.vmem %s0, %s212
        %s214 = smul.u32 %s18, 4
        %s215 = sadd.s32 %s214, %s19
        %s216 = smul.u32 8, %s215
        %s217 = ssub.s32 25, %s216
        %p218 = scmp.lt.s32.totalorder %s217, 8
        %s219 = scalar_select %p218, %s217, 8
        %s220 = smul.u32 128, %s219
        %s221 = smul.u32 %s18, 4
        %s222 = sadd.s32 %s221, %s19
        %s223 = smul.u32 8, %s222
        %s224 = ssub.s32 25, %s223
        %p225 = scmp.lt.s32.totalorder %s224, 8
        %s226 = scalar_select %p225, %s224, 8
        %s227 = smul.u32 128, %s226
        %p228 = scmp.lt.s32.totalorder %s223, 24
        %s229 = scalar_select %p228, %s223, 24
        %s230 = smul.addr %s229, 8
        %s231 = scalar_lea.vmem %s1, %s230
        %s232 = smul.u32 %s18, 4
        %s233 = sadd.s32 %s232, %s19
        %s234 = smul.u32 8, %s233
        %s235 = ssub.s32 25, %s234
        %p236 = scmp.lt.s32.totalorder %s235, 8
        %s237 = scalar_select %p236, %s235, 8
        %s238 = smul.u32 128, %s237
        %p239 = scmp.eq.s32.totalorder %s19, 0
        // Predicated region
        $region29: #{tpu_custom_call.1} parent=27 // pred_check
          %p240 = pneg %p239
        $region30: #{tpu_custom_call.1} parent=27 // pred_check_branch
          %242 = sbr.rel (%p240) target = $region32
        $region31: #{tpu_custom_call.1} parent=27 // pred_region
          %vm243 = vcmask 7168
          %244 = vst.msk [vmem:[#allocation2] sm:$0xff] %vm243, 0.0
          %245 = vst.msk [vmem:[#allocation2 + $0x8] sm:$0xff] %vm243, 0.0
          %246 = vst.msk [vmem:[#allocation2 + $0x10] sm:$0xff] %vm243, 0.0
          %247 = vst.msk [vmem:[#allocation2 + $0x18] sm:$0xff] %vm243, 0.0
          %248 = vst.msk [vmem:[#allocation2 + $0x20] sm:$0xff] %vm243, 0.0
          %249 = vst.msk [vmem:[#allocation2 + $0x28] sm:$0xff] %vm243, 0.0
          %250 = vst.msk [vmem:[#allocation2 + $0x30] sm:$0xff] %vm243, 0.0
          %251 = vst.msk [vmem:[#allocation2 + $0x38] sm:$0xff] %vm243, 0.0
        $region32: #{tpu_custom_call.1} parent=27 // pred_fallthru
          _
        %s252 = smul.u32 %s18, 4
        %s253 = sadd.s32 %s252, %s19
        %s254 = smul.u32 %s253, 64
        %s255 = ssub.s32 200, %s254
        %v256 = vlaneseq
        %v257 = vshrl.u32 %v256, 7
        %v258 = vadd.s32 %v257, 8
        %v259 = vadd.s32 %v257, 16
        %v260 = vadd.s32 %v257, 24
        %v261 = vadd.s32 %v257, 32
        %v262 = vadd.s32 %v257, 40
        %v263 = vadd.s32 %v257, 48
        %v264 = vadd.s32 %v257, 56
        %v265 = vstv %s255
        %vm266 = vcmp.lt.s32.totalorder %v257, %v265
        %vm267 = vcmp.lt.s32.totalorder %v258, %v265
        %vm268 = vcmp.lt.s32.totalorder %v259, %v265
        %vm269 = vcmp.lt.s32.totalorder %v260, %v265
        %vm270 = vcmp.lt.s32.totalorder %v261, %v265
        %vm271 = vcmp.lt.s32.totalorder %v262, %v265
        %vm272 = vcmp.lt.s32.totalorder %v263, %v265
        %vm273 = vcmp.lt.s32.totalorder %v264, %v265
        %v274 = vld [vmem:[%s213] sm:$0xff]
        %v275 = vld [vmem:[%s213 + $0x8] sm:$0xff]
        %v276 = vld [vmem:[%s213 + $0x10] sm:$0xff]
        %v277 = vld [vmem:[%s213 + $0x18] sm:$0xff]
        %v278 = vld [vmem:[%s213 + $0x20] sm:$0xff]
        %v279 = vld [vmem:[%s213 + $0x28] sm:$0xff]
        %v280 = vld [vmem:[%s213 + $0x30] sm:$0xff]
        %v281 = vld [vmem:[%s213 + $0x38] sm:$0xff]
        %v282 = vld [vmem:[%s231] sm:$0xff]
        %v283 = vld [vmem:[%s231 + $0x8] sm:$0xff]
        %v284 = vld [vmem:[%s231 + $0x10] sm:$0xff]
        %v285 = vld [vmem:[%s231 + $0x18] sm:$0xff]
        %v286 = vld [vmem:[%s231 + $0x20] sm:$0xff]
        %v287 = vld [vmem:[%s231 + $0x28] sm:$0xff]
        %v288 = vld [vmem:[%s231 + $0x30] sm:$0xff]
        %v289 = vld [vmem:[%s231 + $0x38] sm:$0xff]
        %290 = vmax.xlane.f32.xlu0 %v274
        %v291 = vpop.xlane.xlu0 %290
        %292 = vmax.xlane.f32.xlu0 %v275
        %v293 = vpop.xlane.xlu0 %292
        %294 = vmax.xlane.f32.xlu0 %v276
        %v295 = vpop.xlane.xlu0 %294
        %296 = vmax.xlane.f32.xlu0 %v277
        %v297 = vpop.xlane.xlu0 %296
        %298 = vmax.xlane.f32.xlu0 %v278
        %v299 = vpop.xlane.xlu0 %298
        %300 = vmax.xlane.f32.xlu0 %v279
        %v301 = vpop.xlane.xlu0 %300
        %302 = vmax.xlane.f32.xlu0 %v280
        %v303 = vpop.xlane.xlu0 %302
        %304 = vmax.xlane.f32.xlu0 %v281
        %v305 = vpop.xlane.xlu0 %304
        %v306 = vsub.f32 %v274, %v291
        %v307 = vsub.f32 %v275, %v293
        %v308 = vsub.f32 %v276, %v295
        %v309 = vsub.f32 %v277, %v297
        %v310 = vsub.f32 %v278, %v299
        %v311 = vsub.f32 %v279, %v301
        %v312 = vsub.f32 %v280, %v303
        %v313 = vsub.f32 %v281, %v305
        %v314 = vmul.f32 %v306, 1.442695
        %v315 = vpow.pop %v314
        %v316 = vmul.f32 %v307, 1.442695
        %v317 = vpow.pop %v316
        %v318 = vmul.f32 %v308, 1.442695
        %v319 = vpow.pop %v318
        %v320 = vmul.f32 %v309, 1.442695
        %v321 = vpow.pop %v320
        %v322 = vmul.f32 %v310, 1.442695
        %v323 = vpow.pop %v322
        %v324 = vmul.f32 %v311, 1.442695
        %v325 = vpow.pop %v324
        %v326 = vmul.f32 %v312, 1.442695
        %v327 = vpow.pop %v326
        %v328 = vmul.f32 %v313, 1.442695
        %v329 = vpow.pop %v328
        %330 = vadd.xlane.f32.xlu0 %v315
        %v331 = vpop.xlane.xlu0 %330
        %332 = vadd.xlane.f32.xlu0 %v317
        %v333 = vpop.xlane.xlu0 %332
        %334 = vadd.xlane.f32.xlu0 %v319
        %v335 = vpop.xlane.xlu0 %334
        %336 = vadd.xlane.f32.xlu0 %v321
        %v337 = vpop.xlane.xlu0 %336
        %338 = vadd.xlane.f32.xlu0 %v323
        %v339 = vpop.xlane.xlu0 %338
        %340 = vadd.xlane.f32.xlu0 %v325
        %v341 = vpop.xlane.xlu0 %340
        %342 = vadd.xlane.f32.xlu0 %v327
        %v343 = vpop.xlane.xlu0 %342
        %344 = vadd.xlane.f32.xlu0 %v329
        %v345 = vpop.xlane.xlu0 %344
        %v346 = vlaneseq
        %v347 = vand.u32 %v346, 127
        %v348 = vcvt.f32.s32.to.zero.pseudo %v282
        %v349 = vcvt.f32.s32.to.zero.pseudo %v283
        %v350 = vcvt.f32.s32.to.zero.pseudo %v284
        %v351 = vcvt.f32.s32.to.zero.pseudo %v285
        %v352 = vcvt.f32.s32.to.zero.pseudo %v286
        %v353 = vcvt.f32.s32.to.zero.pseudo %v287
        %v354 = vcvt.f32.s32.to.zero.pseudo %v288
        %v355 = vcvt.f32.s32.to.zero.pseudo %v289
        %356 = vset.pattern.permute.xlu0 0
        %357 = vperm.xlu0 %356, %v348
        %v358 = vpop.permute.xlu0 %357
        %359 = vset.pattern.permute.xlu0 0
        %360 = vperm.xlu0 %359, %v349
        %v361 = vpop.permute.xlu0 %360
        %362 = vset.pattern.permute.xlu0 0
        %363 = vperm.xlu0 %362, %v350
        %v364 = vpop.permute.xlu0 %363
        %365 = vset.pattern.permute.xlu0 0
        %366 = vperm.xlu0 %365, %v351
        %v367 = vpop.permute.xlu0 %366
        %368 = vset.pattern.permute.xlu0 0
        %369 = vperm.xlu0 %368, %v352
        %v370 = vpop.permute.xlu0 %369
        %371 = vset.pattern.permute.xlu0 0
        %372 = vperm.xlu0 %371, %v353
        %v373 = vpop.permute.xlu0 %372
        %374 = vset.pattern.permute.xlu0 0
        %375 = vperm.xlu0 %374, %v354
        %v376 = vpop.permute.xlu0 %375
        %377 = vset.pattern.permute.xlu0 0
        %378 = vperm.xlu0 %377, %v355
        %v379 = vpop.permute.xlu0 %378
        %vm380 = vcmp.eq.s32.totalorder %v347, %v358
        %vm381 = vcmp.eq.s32.totalorder %v347, %v361
        %vm382 = vcmp.eq.s32.totalorder %v347, %v364
        %vm383 = vcmp.eq.s32.totalorder %v347, %v367
        %vm384 = vcmp.eq.s32.totalorder %v347, %v370
        %vm385 = vcmp.eq.s32.totalorder %v347, %v373
        %vm386 = vcmp.eq.s32.totalorder %v347, %v376
        %vm387 = vcmp.eq.s32.totalorder %v347, %v379
        %v388 = vsel %vm380, %v306, 0.0
        %v389 = vsel %vm381, %v307, 0.0
        %v390 = vsel %vm382, %v308, 0.0
        %v391 = vsel %vm383, %v309, 0.0
        %v392 = vsel %vm384, %v310, 0.0
        %v393 = vsel %vm385, %v311, 0.0
        %v394 = vsel %vm386, %v312, 0.0
        %v395 = vsel %vm387, %v313, 0.0
        %396 = vadd.xlane.f32.xlu0 %v388
        %v397 = vpop.xlane.xlu0 %396
        %398 = vadd.xlane.f32.xlu0 %v389
        %v399 = vpop.xlane.xlu0 %398
        %400 = vadd.xlane.f32.xlu0 %v390
        %v401 = vpop.xlane.xlu0 %400
        %402 = vadd.xlane.f32.xlu0 %v391
        %v403 = vpop.xlane.xlu0 %402
        %404 = vadd.xlane.f32.xlu0 %v392
        %v405 = vpop.xlane.xlu0 %404
        %406 = vadd.xlane.f32.xlu0 %v393
        %v407 = vpop.xlane.xlu0 %406
        %408 = vadd.xlane.f32.xlu0 %v394
        %v409 = vpop.xlane.xlu0 %408
        %410 = vadd.xlane.f32.xlu0 %v395
        %v411 = vpop.xlane.xlu0 %410
        %v412 = vlog2.pop %v331
        %v413 = vmul.f32 %v412, 0.6931472
        %v414 = vlog2.pop %v333
        %v415 = vmul.f32 %v414, 0.6931472
        %v416 = vlog2.pop %v335
        %v417 = vmul.f32 %v416, 0.6931472
        %v418 = vlog2.pop %v337
        %v419 = vmul.f32 %v418, 0.6931472
        %v420 = vlog2.pop %v339
        %v421 = vmul.f32 %v420, 0.6931472
        %v422 = vlog2.pop %v341
        %v423 = vmul.f32 %v422, 0.6931472
        %v424 = vlog2.pop %v343
        %v425 = vmul.f32 %v424, 0.6931472
        %v426 = vlog2.pop %v345
        %v427 = vmul.f32 %v426, 0.6931472
        %v428 = vsub.f32 %v413, %v397
        %v429 = vsub.f32 %v415, %v399
        %v430 = vsub.f32 %v417, %v401
        %v431 = vsub.f32 %v419, %v403
        %v432 = vsub.f32 %v421, %v405
        %v433 = vsub.f32 %v423, %v407
        %v434 = vsub.f32 %v425, %v409
        %v435 = vsub.f32 %v427, %v411
        %v436 = vmax.f32 %v428, 0.0
        %v437 = vmax.f32 %v429, 0.0
        %v438 = vmax.f32 %v430, 0.0
        %v439 = vmax.f32 %v431, 0.0
        %v440 = vmax.f32 %v432, 0.0
        %v441 = vmax.f32 %v433, 0.0
        %v442 = vmax.f32 %v434, 0.0
        %v443 = vmax.f32 %v435, 0.0
        %v444 = vsub.f32 0.0, %v436
        %v445 = vsub.f32 0.0, %v437
        %v446 = vsub.f32 0.0, %v438
        %v447 = vsub.f32 0.0, %v439
        %v448 = vsub.f32 0.0, %v440
        %v449 = vsub.f32 0.0, %v441
        %v450 = vsub.f32 0.0, %v442
        %v451 = vsub.f32 0.0, %v443
        %v452 = vmul.f32 %v444, 1.442695
        %v453 = vpow.pop %v452
        %v454 = vmul.f32 %v445, 1.442695
        %v455 = vpow.pop %v454
        %v456 = vmul.f32 %v446, 1.442695
        %v457 = vpow.pop %v456
        %v458 = vmul.f32 %v447, 1.442695
        %v459 = vpow.pop %v458
        %v460 = vmul.f32 %v448, 1.442695
        %v461 = vpow.pop %v460
        %v462 = vmul.f32 %v449, 1.442695
        %v463 = vpow.pop %v462
        %v464 = vmul.f32 %v450, 1.442695
        %v465 = vpow.pop %v464
        %v466 = vmul.f32 %v451, 1.442695
        %v467 = vpow.pop %v466
        %v468 = vsub.f32 1.0, %v453
        %v469 = vsub.f32 1.0, %v455
        %v470 = vsub.f32 1.0, %v457
        %v471 = vsub.f32 1.0, %v459
        %v472 = vsub.f32 1.0, %v461
        %v473 = vsub.f32 1.0, %v463
        %v474 = vsub.f32 1.0, %v465
        %v475 = vsub.f32 1.0, %v467
        %v476 = vmul.f32 %v468, %v468
        %v477 = vmul.f32 %v469, %v469
        %v478 = vmul.f32 %v470, %v470
        %v479 = vmul.f32 %v471, %v471
        %v480 = vmul.f32 %v472, %v472
        %v481 = vmul.f32 %v473, %v473
        %v482 = vmul.f32 %v474, %v474
        %v483 = vmul.f32 %v475, %v475
        %v484 = vmul.f32 %v282, %v476
        %v485 = vmul.f32 %v283, %v477
        %v486 = vmul.f32 %v284, %v478
        %v487 = vmul.f32 %v285, %v479
        %v488 = vmul.f32 %v286, %v480
        %v489 = vmul.f32 %v287, %v481
        %v490 = vmul.f32 %v288, %v482
        %v491 = vmul.f32 %v289, %v483
        %v492 = vmul.f32 %v484, %v436
        %v493 = vmul.f32 %v485, %v437
        %v494 = vmul.f32 %v486, %v438
        %v495 = vmul.f32 %v487, %v439
        %v496 = vmul.f32 %v488, %v440
        %v497 = vmul.f32 %v489, %v441
        %v498 = vmul.f32 %v490, %v442
        %v499 = vmul.f32 %v491, %v443
        %v500 = vsel %vm266, %v492, 0.0
        %v501 = vsel %vm267, %v493, 0.0
        %v502 = vsel %vm268, %v494, 0.0
        %v503 = vsel %vm269, %v495, 0.0
        %v504 = vsel %vm270, %v496, 0.0
        %v505 = vsel %vm271, %v497, 0.0
        %v506 = vsel %vm272, %v498, 0.0
        %v507 = vsel %vm273, %v499, 0.0
        %v508 = vld [vmem:[#allocation2] sm:$0xff]
        %v509 = vld [vmem:[#allocation2 + $0x8] sm:$0xff]
        %v510 = vld [vmem:[#allocation2 + $0x10] sm:$0xff]
        %v511 = vld [vmem:[#allocation2 + $0x18] sm:$0xff]
        %v512 = vld [vmem:[#allocation2 + $0x20] sm:$0xff]
        %v513 = vld [vmem:[#allocation2 + $0x28] sm:$0xff]
        %v514 = vld [vmem:[#allocation2 + $0x30] sm:$0xff]
        %v515 = vld [vmem:[#allocation2 + $0x38] sm:$0xff]
        %524 = vrot.lane.b32.xlu0 %v500, 127
        %v525 = vpop.permute.xlu0 %524
        %526 = vrot.lane.b32.xlu0 %v501, 127
        %v527 = vpop.permute.xlu0 %526
        %528 = vrot.lane.b32.xlu0 %v502, 127
        %v529 = vpop.permute.xlu0 %528
        %530 = vrot.lane.b32.xlu0 %v503, 127
        %v531 = vpop.permute.xlu0 %530
        %532 = vrot.lane.b32.xlu0 %v504, 127
        %v533 = vpop.permute.xlu0 %532
        %534 = vrot.lane.b32.xlu0 %v505, 127
        %v535 = vpop.permute.xlu0 %534
        %536 = vrot.lane.b32.xlu0 %v506, 127
        %v537 = vpop.permute.xlu0 %536
        %538 = vrot.lane.b32.xlu0 %v507, 127
        %v539 = vpop.permute.xlu0 %538
        %v548 = vadd.f32 %v508, %v525
        %v549 = vadd.f32 %v509, %v527
        %v550 = vadd.f32 %v510, %v529
        %v551 = vadd.f32 %v511, %v531
        %v552 = vadd.f32 %v512, %v533
        %v553 = vadd.f32 %v513, %v535
        %v554 = vadd.f32 %v514, %v537
        %v555 = vadd.f32 %v515, %v539
        %vm556 = vcmask 7168
        %557 = vst.msk [vmem:[#allocation2] sm:$0xff] %vm556, %v548
        %558 = vst.msk [vmem:[#allocation2 + $0x8] sm:$0xff] %vm556, %v549
        %559 = vst.msk [vmem:[#allocation2 + $0x10] sm:$0xff] %vm556, %v550
        %560 = vst.msk [vmem:[#allocation2 + $0x18] sm:$0xff] %vm556, %v551
        %561 = vst.msk [vmem:[#allocation2 + $0x20] sm:$0xff] %vm556, %v552
        %562 = vst.msk [vmem:[#allocation2 + $0x28] sm:$0xff] %vm556, %v553
        %563 = vst.msk [vmem:[#allocation2 + $0x30] sm:$0xff] %vm556, %v554
        %564 = vst.msk [vmem:[#allocation2 + $0x38] sm:$0xff] %vm556, %v555
        %p565 = scmp.eq.s32.totalorder %s19, 3
        // Predicated region
        $region33: #{tpu_custom_call.1} parent=27 // pred_check
          %p566 = pneg %p565
        $region34: #{tpu_custom_call.1} parent=27 // pred_check_branch
          %568 = sbr.rel (%p566) target = $region36
        $region35: #{tpu_custom_call.1} parent=27 // pred_region
          %v569 = vld [vmem:[#allocation2] sm:$0xff]
          %v570 = vld [vmem:[#allocation2 + $0x8] sm:$0xff]
          %v571 = vld [vmem:[#allocation2 + $0x10] sm:$0xff]
          %v572 = vld [vmem:[#allocation2 + $0x18] sm:$0xff]
          %v573 = vld [vmem:[#allocation2 + $0x20] sm:$0xff]
          %v574 = vld [vmem:[#allocation2 + $0x28] sm:$0xff]
          %v575 = vld [vmem:[#allocation2 + $0x30] sm:$0xff]
          %v576 = vld [vmem:[#allocation2 + $0x38] sm:$0xff]
          %v577 = vsel %vm556, %v569, 0.0
          %v578 = vsel %vm556, %v570, 0.0
          %v579 = vadd.f32 %v577, %v578
          %v580 = vsel %vm556, %v571, 0.0
          %v581 = vadd.f32 %v579, %v580
          %v582 = vsel %vm556, %v572, 0.0
          %v583 = vadd.f32 %v581, %v582
          %v584 = vsel %vm556, %v573, 0.0
          %v585 = vadd.f32 %v583, %v584
          %v586 = vsel %vm556, %v574, 0.0
          %v587 = vadd.f32 %v585, %v586
          %v588 = vsel %vm556, %v575, 0.0
          %v589 = vadd.f32 %v587, %v588
          %v590 = vsel %vm556, %v576, 0.0
          %v591 = vadd.f32 %v589, %v590
          %592 = vadd.xlane.f32.xlu0 %v591
          %v593 = vpop.xlane.xlu0 %592
          %v594 = vrot.slane %v593, 4
          %v595 = vadd.f32 %v593, %v594
          %v596 = vrot.slane %v595, 2
          %v597 = vadd.f32 %v595, %v596
          %v598 = vrot.slane %v597, 1
          %v599 = vadd.f32 %v597, %v598
          %s600 = vtos %v599
          %v601 = vstv %s600
          %602 = vst [vmem:[#allocation3] sm:$0xff] %v601
        $region36: #{tpu_custom_call.1} parent=27 // pred_fallthru
          _
        // Predicated region
        $region37: #{tpu_custom_call.1} parent=27 // pred_check
          %p603 = pneg %p104
        $region38: #{tpu_custom_call.1} parent=27 // pred_check_branch
          %605 = sbr.rel (%p603) target = $region40
        $region39: #{tpu_custom_call.1} parent=27 // pred_region
          %s607 = ssub.s32 128, 128
          %608 = vsyncadd [#allocation4], %s607
          %s609 = smul.addr %s18, 128
          %s610 = scalar_lea.hbm %s2, %s609
          %s612 = sshll.u32 [#allocation3], 4
          %s613 = int_to_ptr.vmem [resolvable:$true] %s612
          %615 = dma.vmem_to_hbm [thread:$0]  %s613, 128, %s610, [#allocation4]
        $region40: #{tpu_custom_call.1} parent=27 // pred_fallthru
          _
        // Predicated region
        $region41: #{tpu_custom_call.1} parent=27 // pred_check
          %p616 = pneg %p104
        $region42: #{tpu_custom_call.1} parent=27 // pred_check_branch
          %618 = sbr.rel (%p616) target = $region44
        $region43: #{tpu_custom_call.1} parent=27 // pred_region
          %619 = dma.done [#allocation4], 128
        $region44: #{tpu_custom_call.1} parent=27 // pred_fallthru
          _
      $region28: #{tpu_custom_call.1} parent=5 // pred_fallthru
        _
      %p620 = scmp.le.s32.totalorder 2, %s9
      // Predicated region
      $region45: #{tpu_custom_call.1} parent=5 // pred_check
        %p621 = pneg %p620
      $region46: #{tpu_custom_call.1} parent=5 // pred_check_branch
        %623 = sbr.rel (%p621) target = $region48
      $region47: #{tpu_custom_call.1} parent=5 // pred_region
        %s624 = ssub.s32 %s9, 2
      $region48: #{tpu_custom_call.1} parent=5 // pred_fallthru
        _
    $region6: #{tpu_custom_call.1} parent=1 // loop_footer
      %s13 = sadd.s32 1, %s9
    $region7: #{tpu_custom_call.1} parent=1 // loop_footer_branch
      %8 = sbr.rel target = $region3
    $region8: #{tpu_custom_call.1} parent=1 // loop_exit
      _
    %625 = vsyncpa [#allocation4], 1
    %s626 = scalar_lea.sflag [#allocation4], 1
    %627 = vsyncpa %s626, 1

</llo_original>
